<compile_context>
chip_gen: v5e
topology: v5e:2x2
jax: 0.10.0
libtpu: 0.0.40
codegen_flags: <defaults>
</compile_context>

<pallas_src>
import numpy as np
import jax
import jax.numpy as jnp
from jax.experimental import pallas as pl
from jax.experimental.pallas import tpu as pltpu


def _round_up(x, m):
    return ((x + m - 1) // m) * m


# -----------------------------------------------------------------------------
# Fused matmul + bias kernel: (tb, K) @ (K, tn) + (1, tn) -> (tb, tn), f32 acc.
# -----------------------------------------------------------------------------
def _matmul_bias_kernel(x_ref, w_ref, b_ref, o_ref):
    o_ref[...] = (
        jnp.dot(x_ref[...], w_ref[...], preferred_element_type=jnp.float32)
        + b_ref[...]
    )


def matmul_bias(x, w, b2d, *, tb, tn):
    """x (B, K) @ w (K, N) + b (1, N) -> (B, N) float32.

    Grid = (N // tn, B // tb) with the batch axis innermost: the weight tile's
    block index is constant across consecutive grid steps, so each weight slab
    is DMA'd once per N tile and reused for every batch tile.
    """
    B, K = x.shape
    Kw, N = w.shape
    assert K == Kw and B % tb == 0 and N % tn == 0
    assert tn % 128 == 0 and tb % 8 == 0

    def isize(a):
        return jnp.dtype(a.dtype).itemsize

    # Double-buffered per-step working set -> explicit scoped-VMEM limit
    # (stays far below v7x's 64 MiB; also works on v5e/v6e defaults).
    need = 2 * (tb * K * isize(x) + K * tn * isize(w) + 8 * tn * 4 + tb * tn * 4)
    vmem_limit = int(min(48 << 20, max(32 << 20, 2 * need)))

    cost = pl.CostEstimate(
        flops=2 * B * K * N,
        transcendentals=0,
        bytes_accessed=B * K * isize(x) + K * N * isize(w) + N * 4 + B * N * 4,
    )

    return pl.pallas_call(
        _matmul_bias_kernel,
        out_shape=jax.ShapeDtypeStruct((B, N), jnp.float32),
        grid=(N // tn, B // tb),
        in_specs=[
            pl.BlockSpec((tb, K), lambda n, b: (b, 0)),   # latents
            pl.BlockSpec((K, tn), lambda n, b: (0, n)),   # folded weight tile
            pl.BlockSpec((1, tn), lambda n, b: (0, n)),   # folded bias tile
        ],
        out_specs=pl.BlockSpec((tb, tn), lambda n, b: (b, n)),
        compiler_params=pltpu.CompilerParams(
            dimension_semantics=("parallel", "parallel"),
            vmem_limit_bytes=vmem_limit,
        ),
        cost_estimate=cost,
    )(x, w, b2d)


# -----------------------------------------------------------------------------
# Module wrapper
# -----------------------------------------------------------------------------
class HyperNetworkSemiTwoLayerPallas:
    """JAX/Pallas port of HyperNetworkSemiTwoLayer (forward pass)."""

    TB_MAX = 128   # batch tile (fills the MXU M dimension)
    TN_MAX = 2048  # lane tile for the folded-weight N dimension

    def __init__(self, z_dim, in_size, out_size, unit_weight_vec_size, key,
                 weight_dtype=jnp.bfloat16):
        self.z_dim = z_dim
        self.in_size = in_size
        self.out_size = out_size
        self.unit_dim = unit_weight_vec_size
        self.n2 = out_size * unit_weight_vec_size
        self.N = in_size * self.n2          # flat output width = out*in*unit
        self.weight_dtype = weight_dtype

        weight_init_std = np.sqrt(np.sqrt(1.0 / (self.unit_dim * z_dim * z_dim)))
        bound = np.sqrt(3.0) * weight_init_std

        k1, k2 = jax.random.split(key)
        # Master parameters kept in f32 (matches torch uniform_/zeros semantics).
        self.w1 = jax.random.uniform(k1, (z_dim, in_size * z_dim),
                                     minval=-bound, maxval=bound, dtype=jnp.float32)
        self.b1 = jnp.zeros((in_size * z_dim,), jnp.float32)
        self.w2 = jax.random.uniform(k2, (z_dim, self.n2),
                                     minval=-bound, maxval=bound, dtype=jnp.float32)
        self.b2 = jnp.zeros((self.n2,), jnp.float32)

        # N tiling: single tile if it fits, else TN_MAX-lane tiles; pad N so the
        # tile divides evenly and every output row store is unmasked/lane-dense.
        n128 = _round_up(self.N, 128)
        self.tn = n128 if n128 <= self.TN_MAX else self.TN_MAX
        self.n_pad = _round_up(self.N, self.tn)

        self._refold()

    # -- parameter folding (init-time / on parameter update) ------------------
    def _fold(self, w1, b1, w2, b2):
        z, in_size, n2, N = self.z_dim, self.in_size, self.n2, self.N
        w1r = w1.reshape(z, in_size, z)
        w_comb = jnp.einsum("kij,jn->kin", w1r, w2).reshape(z, N)
        b_comb = (b1.reshape(in_size, z) @ w2 + b2[None, :]).reshape(1, N)
        pad = self.n_pad - N
        if pad:
            w_comb = jnp.pad(w_comb, ((0, 0), (0, pad)))
            b_comb = jnp.pad(b_comb, ((0, 0), (0, pad)))
        return w_comb.astype(self.weight_dtype), b_comb.astype(jnp.float32)

    def _refold(self):
        """Rebuild the folded weight/bias. MUST be called after any update to
        w1/b1/w2/b2 (e.g. ES perturbations), otherwise w_comb/b_comb are stale."""
        self.w_comb, self.b_comb = self._fold(self.w1, self.b1, self.w2, self.b2)

    # -- kernel invocation -----------------------------------------------------
    def _run(self, zs2d, w_comb, b_comb):
        B = zs2d.shape[0]
        tb = min(self.TB_MAX, _round_up(B, 8))
        b_pad = _round_up(B, tb)
        x = zs2d.astype(self.weight_dtype)
        if b_pad != B:
            x = jnp.pad(x, ((0, b_pad - B), (0, 0)))
        flat = matmul_bias(x, w_comb, b_comb, tb=tb, tn=self.tn)
        # Drop batch padding and lane padding BEFORE the row-major view.
        return flat[:B, :self.N]

    def __call__(self, z, custom_params=None, prefix=None):
        """z: (z_dim,) -> (out_size, in_size, unit_dim)."""
        if custom_params is None:
            w_comb, b_comb = self.w_comb, self.b_comb
        else:
            # TODO(synk): custom_params branch re-folds per call; cache the fold
            # per parameter set when it is reused across many forwards.
            w_comb, b_comb = self._fold(
                custom_params[prefix + '.w1'], custom_params[prefix + '.b1'],
                custom_params[prefix + '.w2'], custom_params[prefix + '.b2'])
        flat = self._run(z.reshape(1, self.z_dim), w_comb, b_comb)
        # Equivalent of torch .view(out_size, in_size, unit_dim) on the flat buffer.
        return flat.reshape(self.out_size, self.in_size, self.unit_dim)

    def generate_batched(self, zs):
        """zs: (B, z_dim) -> (B, out_size, in_size, unit_dim). ES fast path."""
        B = zs.shape[0]
        flat = self._run(zs.reshape(B, self.z_dim), self.w_comb, self.b_comb)
        return flat.reshape(B, self.out_size, self.in_size, self.unit_dim)

    # -- pure-jnp reference of the original two-stage forward -------------------
    def reference(self, z):
        h_in = jnp.matmul(z.reshape(1, self.z_dim), self.w1) + self.b1
        h_in = h_in.reshape(self.in_size, self.z_dim)
        h_final = jnp.matmul(h_in, self.w2) + self.b2
        return h_final.reshape(self.out_size, self.in_size, self.unit_dim)


if __name__ == "__main__":
    # Small shapes consistent with the module's forward.
    z_dim, in_size, out_size, unit_dim = 8, 4, 3, 16

    key = jax.random.PRNGKey(0)
    k_params, k_z, k_zb = jax.random.split(key, 3)

    z = jax.random.normal(k_z, (z_dim,), dtype=jnp.float32)
    B = 16
    zs = jax.random.normal(k_zb, (B, z_dim), dtype=jnp.float32)

    # --- f32 instance: tight semantics check (pre-fold only reorders FP sums) ---
    net32 = HyperNetworkSemiTwoLayerPallas(
        z_dim, in_size, out_size, unit_dim, k_params, weight_dtype=jnp.float32)

    out = jax.block_until_ready(net32(z))
    ref = jax.block_until_ready(net32.reference(z))
    assert out.shape == (out_size, in_size, unit_dim)
    np.testing.assert_allclose(np.asarray(out), np.asarray(ref), rtol=1e-4, atol=1e-5)

    out_b = jax.block_until_ready(net32.generate_batched(zs))
    ref_b = jax.block_until_ready(jax.vmap(net32.reference)(zs))
    assert out_b.shape == (B, out_size, in_size, unit_dim)
    np.testing.assert_allclose(np.asarray(out_b), np.asarray(ref_b), rtol=1e-4, atol=1e-5)

    # custom_params/prefix branch (same arrays -> must match the reference).
    params = {"hyper.w1": net32.w1, "hyper.b1": net32.b1,
              "hyper.w2": net32.w2, "hyper.b2": net32.b2}
    out_c = jax.block_until_ready(net32(z, custom_params=params, prefix="hyper"))
    np.testing.assert_allclose(np.asarray(out_c), np.asarray(ref), rtol=1e-4, atol=1e-5)

    # --- default bf16-weight instance: the HBM-bandwidth-bound ES fast path ---
    net16 = HyperNetworkSemiTwoLayerPallas(
        z_dim, in_size, out_size, unit_dim, k_params)  # weight_dtype=bf16
    out16 = jax.block_until_ready(net16.generate_batched(zs))
    ref16 = jax.block_until_ready(jax.vmap(net16.reference)(zs))
    np.testing.assert_allclose(np.asarray(out16), np.asarray(ref16),
                               rtol=2e-2, atol=2e-2)

    print("KERNEL_OK")
</pallas_src>

<mosaic_0001>
module attributes {stable_mosaic.version = 11 : i64} {
  func.func @_matmul_bias_kernel(%arg0: i32, %arg1: i32, %arg2: memref<8x8xf32, #tpu.memory_space<vmem>>, %arg3: memref<8x256xf32, #tpu.memory_space<vmem>>, %arg4: memref<1x256xf32, #tpu.memory_space<vmem>>, %arg5: memref<8x256xf32, #tpu.memory_space<vmem>>) attributes {dimension_semantics = [#tpu.dimension_semantics<parallel>, #tpu.dimension_semantics<parallel>], iteration_bounds = array<i64: 1, 1>, scalar_prefetch = 0 : i64, scratch_operands = 0 : i64, tpu.core_type = #tpu.core_type<tc>, window_params = [{transform_indices = @transform_0, window_bounds = array<i64: 8, 8>}, {transform_indices = @transform_1, window_bounds = array<i64: 8, 256>}, {transform_indices = @transform_2, window_bounds = array<i64: 1, 256>}, {transform_indices = @transform_3, window_bounds = array<i64: 8, 256>}]} {
    %c0 = arith.constant 0 : index
    %c0_0 = arith.constant 0 : index
    %0 = vector.load %arg2[%c0, %c0_0] : memref<8x8xf32, #tpu.memory_space<vmem>>, vector<8x8xf32>
    %c0_1 = arith.constant 0 : index
    %c0_2 = arith.constant 0 : index
    %1 = vector.load %arg3[%c0_1, %c0_2] : memref<8x256xf32, #tpu.memory_space<vmem>>, vector<8x256xf32>
    %cst = arith.constant dense<0.000000e+00> : vector<8x256xf32>
    %2 = tpu.matmul %0, %1, %cst {dimension_numbers = #tpu.dot_dimension_numbers<[1], [0], [0], [1], [0, 0, 1, 1], [], []>} : vector<8x8xf32>, vector<8x256xf32>, vector<8x256xf32> -> vector<8x256xf32>
    %c0_3 = arith.constant 0 : index
    %c0_4 = arith.constant 0 : index
    %3 = vector.load %arg4[%c0_3, %c0_4] : memref<1x256xf32, #tpu.memory_space<vmem>>, vector<1x256xf32>
    %4 = vector.broadcast %3 : vector<1x256xf32> to vector<8x256xf32>
    %5 = arith.addf %2, %4 : vector<8x256xf32>
    %c0_5 = arith.constant 0 : index
    %c0_6 = arith.constant 0 : index
    %6 = vector.load %arg5[%c0_5, %c0_6] : memref<8x256xf32, #tpu.memory_space<vmem>>, vector<8x256xf32>
    tpu.vector_store %arg5[%c0_5, %c0_6], %5 {strides = array<i32>} : memref<8x256xf32, #tpu.memory_space<vmem>>, vector<8x256xf32>,
    return
  }
  func.func @transform_0(%arg0: i32, %arg1: i32) -> (i32, i32) {
    %c0_i32 = arith.constant 0 : i32
    %c0_i32_0 = arith.constant 0 : i32
    return %arg1, %c0_i32 : i32, i32
  }
  func.func @transform_1(%arg0: i32, %arg1: i32) -> (i32, i32) {
    %c0_i32 = arith.constant 0 : i32
    %c0_i32_0 = arith.constant 0 : i32
    return %c0_i32, %arg0 : i32, i32
  }
  func.func @transform_2(%arg0: i32, %arg1: i32) -> (i32, i32) {
    %c0_i32 = arith.constant 0 : i32
    %c0_i32_0 = arith.constant 0 : i32
    return %c0_i32, %arg0 : i32, i32
  }
  func.func @transform_3(%arg0: i32, %arg1: i32) -> (i32, i32) {
    %c0_i32 = arith.constant 0 : i32
    return %arg1, %arg0 : i32, i32
  }
}

</mosaic_0001>

<llo_original>
// kernel: tpu_custom_call.1
$region0: #{tpu_custom_call.1}
  #allocation0 [shape = 'u32[]', space=smem, size = 0x4, offset = 0x4, fixed_abs, tag = 'smem constant byte address 0x4 - core index']
  #allocation1 [shape = 'u32[72,128]{1,0:T(1,128)}', space=vmem, size = 0x9000, scoped, tag = 'internal scratch']
  %s0 = inlined_call_operand.hbm [shape: f32[8,8], index: 0, kind: input, shape index: {}]
  %s1 = inlined_call_operand.hbm [shape: f32[8,256], index: 1, kind: input, shape index: {}]
  %s2 = inlined_call_operand.hbm [shape: f32[1,256], index: 2, kind: input, shape index: {}]
  %s3 = inlined_call_operand.hbm [shape: f32[8,256], index: 3, kind: output, shape index: {}]
  %s4 = sld [smem:[#allocation0]]
  $region34: #{tpu_custom_call.1} parent=0
    _
  %s6 = ssub.s32 1, %s4
  %s7 = scalar_select 0, %s6, %s4
  $region1: #{tpu_custom_call.1} parent=0
    #allocation2 [shape = 'u8[4096]{0}', space=vmem, size = 0x1000, scoped, tag = 'input window, operand 0, single buffered']
    #allocation3 [shape = 's32[1]{0}', space=sflag, size = 0x4, scoped, tag = 'scoped memory for tpu_custom_call.1']
    #allocation4 [shape = 's32[1]{0}', space=sflag, size = 0x4, scoped, tag = 'scoped memory for tpu_custom_call.1']
    #allocation5 [shape = 'u8[8192]{0}', space=vmem, size = 0x2000, scoped, tag = 'input window, operand 1, single buffered']
    #allocation6 [shape = 's32[1]{0}', space=sflag, size = 0x4, scoped, tag = 'scoped memory for tpu_custom_call.1']
    #allocation7 [shape = 'u8[1024]{0}', space=vmem, size = 0x400, scoped, tag = 'input window, operand 2, single buffered']
    #allocation8 [shape = 'u8[8192]{0}', space=vmem, size = 0x2000, scoped, tag = 'output window, operand 0, single buffered']
    %8 = vsyncpa [#allocation3], 0
    %9 = vsyncpa [#allocation6], 0
    %10 = vsyncpa [#allocation4], 0
    // Predicated region
    $region2: #{tpu_custom_call.1} parent=1 // pred_check
      _
    $region3: #{tpu_custom_call.1} parent=1 // pred_check_branch
      %12 = sbr.rel (0) target = $region5
    $region4: #{tpu_custom_call.1} parent=1 // pred_region
      %14 = vsyncadd [#allocation3], 0
      %s16 = sshll.u32 %s0, 4
      %s17 = int_to_ptr.hbm [resolvable:$true] %s16
      %s18 = sshll.u32 [#allocation2], 4
      %s19 = int_to_ptr.vmem [resolvable:$true] %s18
      %21 = dma.hbm_to_vmem [thread:$0]  %s17, 128, %s19, [#allocation3]
    $region5: #{tpu_custom_call.1} parent=1 // pred_fallthru
      _
    // Predicated region
    $region6: #{tpu_custom_call.1} parent=1 // pred_check
      _
    $region7: #{tpu_custom_call.1} parent=1 // pred_check_branch
      %23 = sbr.rel (0) target = $region9
    $region8: #{tpu_custom_call.1} parent=1 // pred_region
      %25 = vsyncadd [#allocation6], 0
      %s27 = sshll.u32 %s1, 4
      %s28 = int_to_ptr.hbm [resolvable:$true] %s27
      %s29 = sshll.u32 [#allocation5], 4
      %s30 = int_to_ptr.vmem [resolvable:$true] %s29
      %32 = dma.hbm_to_vmem [thread:$0]  %s28, 256, %s30, [#allocation6]
    $region9: #{tpu_custom_call.1} parent=1 // pred_fallthru
      _
    // Predicated region
    $region10: #{tpu_custom_call.1} parent=1 // pred_check
      _
    $region11: #{tpu_custom_call.1} parent=1 // pred_check_branch
      %34 = sbr.rel (0) target = $region13
    $region12: #{tpu_custom_call.1} parent=1 // pred_region
      %36 = vsyncadd [#allocation6], 0
      %s38 = sshll.u32 %s2, 4
      %s39 = int_to_ptr.hbm [resolvable:$true] %s38
      %s40 = sshll.u32 [#allocation7], 4
      %s41 = int_to_ptr.vmem [resolvable:$true] %s40
      %43 = dma.hbm_to_vmem [thread:$0]  %s39, 32, %s41, [#allocation6]
    $region13: #{tpu_custom_call.1} parent=1 // pred_fallthru
      _
    // Predicated region
    $region14: #{tpu_custom_call.1} parent=1 // pred_check
      _
    $region15: #{tpu_custom_call.1} parent=1 // pred_check_branch
      %45 = sbr.rel (0) target = $region17
    $region16: #{tpu_custom_call.1} parent=1 // pred_region
      %47 = dma.done [#allocation3], 128
    $region17: #{tpu_custom_call.1} parent=1 // pred_fallthru
      _
    // Predicated region
    $region18: #{tpu_custom_call.1} parent=1 // pred_check
      _
    $region19: #{tpu_custom_call.1} parent=1 // pred_check_branch
      %49 = sbr.rel (0) target = $region21
    $region20: #{tpu_custom_call.1} parent=1 // pred_region
      %51 = dma.done [#allocation6], 256
    $region21: #{tpu_custom_call.1} parent=1 // pred_fallthru
      _
    // Predicated region
    $region22: #{tpu_custom_call.1} parent=1 // pred_check
      _
    $region23: #{tpu_custom_call.1} parent=1 // pred_check_branch
      %53 = sbr.rel (0) target = $region25
    $region24: #{tpu_custom_call.1} parent=1 // pred_region
      %55 = dma.done [#allocation6], 32
    $region25: #{tpu_custom_call.1} parent=1 // pred_fallthru
      _
    %v56 = vld [vmem:[#allocation2] sm:$0xff]
    %v57 = vld [vmem:[#allocation5] sm:$0xff]
    %v58 = vld [vmem:[#allocation5 + $0x8] sm:$0xff]
    %v59 = vld [vmem:[#allocation7] sm:$0x3]
    %v61 = vperm.slane %v59, 0
    %v62 = vperm.slane %v59, 1
    %vm65 = vcmask 64512
    %v67 = vsel %vm65, %v56, 0
    %69 = vmatpush.msra.mxu0 0.0
    %70 = vmatpush.msra.mxu0 0.0
    %71 = vmatpush.msra.mxu0 0.0
    %72 = vmatpush.msra.mxu0 0.0
    %73 = vmatpush.msra.mxu0 0.0
    %74 = vmatpush.msra.mxu0 0.0
    %75 = vmatpush.msra.mxu0 0.0
    %76 = vmatpush.msra.mxu0 0.0
    %77 = vmatpush.msra.mxu0 0.0
    %78 = vmatpush.msra.mxu0 0.0
    %79 = vmatpush.msra.mxu0 0.0
    %80 = vmatpush.msra.mxu0 0.0
    %81 = vmatpush.msra.mxu0 0.0
    %82 = vmatpush.msra.mxu0 0.0
    %83 = vmatpush.msra.mxu0 0.0
    %84 = vmatpush.msra.mxu0 %v57
    %85 = vmatmul.f32.gmra.mxu0 %v67
    %v86 = vpop.f32.mrf.mxu0
    %v87 = vadd.f32 %v61, %v86
    %88 = vdwg.mxu0
    %89 = vmatpush.msra.mxu0 0.0
    %90 = vmatpush.msra.mxu0 0.0
    %91 = vmatpush.msra.mxu0 0.0
    %92 = vmatpush.msra.mxu0 0.0
    %93 = vmatpush.msra.mxu0 0.0
    %94 = vmatpush.msra.mxu0 0.0
    %95 = vmatpush.msra.mxu0 0.0
    %96 = vmatpush.msra.mxu0 0.0
    %97 = vmatpush.msra.mxu0 0.0
    %98 = vmatpush.msra.mxu0 0.0
    %99 = vmatpush.msra.mxu0 0.0
    %100 = vmatpush.msra.mxu0 0.0
    %101 = vmatpush.msra.mxu0 0.0
    %102 = vmatpush.msra.mxu0 0.0
    %103 = vmatpush.msra.mxu0 0.0
    %104 = vmatpush.msra.mxu0 %v58
    %105 = vmatmul.f32.gmra.mxu0 %v67
    %v106 = vpop.f32.mrf.mxu0
    %v107 = vadd.f32 %v62, %v106
    %108 = vdwg.mxu0
    %109 = vst [vmem:[#allocation8] sm:$0xff] %v87
    %110 = vst [vmem:[#allocation8 + $0x8] sm:$0xff] %v107
    // Predicated region
    $region26: #{tpu_custom_call.1} parent=1 // pred_check
      _
    $region27: #{tpu_custom_call.1} parent=1 // pred_check_branch
      %112 = sbr.rel (0) target = $region29
    $region28: #{tpu_custom_call.1} parent=1 // pred_region
      %114 = vsyncadd [#allocation4], 0
      %s116 = sshll.u32 [#allocation8], 4
      %s117 = int_to_ptr.vmem [resolvable:$true] %s116
      %s118 = sshll.u32 %s3, 4
      %s119 = int_to_ptr.hbm [resolvable:$true] %s118
      %121 = dma.vmem_to_hbm [thread:$0]  %s117, 256, %s119, [#allocation4]
    $region29: #{tpu_custom_call.1} parent=1 // pred_fallthru
      _
    // Predicated region
    $region30: #{tpu_custom_call.1} parent=1 // pred_check
      _
    $region31: #{tpu_custom_call.1} parent=1 // pred_check_branch
      %123 = sbr.rel (0) target = $region33
    $region32: #{tpu_custom_call.1} parent=1 // pred_region
      %125 = dma.done [#allocation4], 256
    $region33: #{tpu_custom_call.1} parent=1 // pred_fallthru
      _
    %126 = vsyncpa [#allocation3], 1
    %127 = vsyncpa [#allocation6], 1
    %128 = vsyncpa [#allocation4], 1

</llo_original>
